<compile_context>
chip_gen: v5e
topology: v5e:2x2
jax: 0.10.0
libtpu: 0.0.40
codegen_flags: <defaults>
</compile_context>

<pallas_src>
import jax
import jax.numpy as jnp
from jax.experimental import pallas as pl
from jax.experimental.pallas import tpu as pltpu


_LANE = 128
_TILE_B_CANDIDATES = (1024, 512, 256, 128, 64, 32, 16)


def _round_up(x, m):
    return ((x + m - 1) // m) * m


def _vmem_limit_bytes():
    # Generation-aware budget: ~75% of reported capacity, capped with headroom.
    try:
        cap = pltpu.get_tpu_info().vmem_capacity_bytes
    except Exception:
        cap = 64 * 1024 * 1024  # v7x-safe default if the query is unavailable
    return max(32 * 1024 * 1024, min((cap * 3) // 4, 112 * 1024 * 1024))


def _pick_tile_b(B, max_tile):
    cands = [t for t in _TILE_B_CANDIDATES if t <= max_tile]
    if not cands:
        cands = [_TILE_B_CANDIDATES[-1]]
    # Prefer the largest tile that (a) wastes <= 12.5% of the batch in padding
    # and (b) leaves >= 2 grid steps so v7x megacore has work to split.
    for t in cands:
        bp = _round_up(B, t)
        if (bp - B) * 8 <= B and bp // t >= 2:
            return t
    # Small / awkward batches: minimize padded rows (largest tile on ties).
    return min(cands, key=lambda t: (_round_up(B, t) - B, -t))


def nonlinear_model_kernel(x_ref, w1_ref, b1_ref, w2_ref, b2_ref, o_ref):
    # l1: Linear(inputs -> hiddens_p) on the MXU (bf16 operands, f32 acc).
    h = jnp.dot(x_ref[...], w1_ref[...], preferred_element_type=jnp.float32)
    # Bias + ReLU in f32; b1 is (1, hiddens_p) and broadcasts. Padded hidden
    # columns have zero weight and zero bias -> stay exactly zero.
    h = jnp.maximum(h + b1_ref[...], 0.0)
    # l2: Linear(hiddens_p -> outputs_p); cast activations back to MXU dtype.
    y = jnp.dot(h.astype(w2_ref.dtype), w2_ref[...],
                preferred_element_type=jnp.float32)
    y = y + b2_ref[...]
    # L2Norm along features: padded output columns are exactly zero so they do
    # not perturb sum(y*y).  rsqrt lands on the EUP slot, multiply on the VPU.
    # No eps, matching the reference `x / x.norm(p=2, dim=1)`.
    inv = jax.lax.rsqrt(jnp.sum(y * y, axis=1, keepdims=True))
    o_ref[...] = (y * inv).astype(o_ref.dtype)


def nonlinear_model(x, w1, b1, w2, b2, *, tile_b=None,
                    compute_dtype=jnp.bfloat16):
    """Forward pass of NonLinearModel.

    x : [B, inputs] (or [inputs] for an unbatched vector)
    w1: [inputs, hiddens]   b1: [hiddens] or [1, hiddens]
    w2: [hiddens, outputs]  b2: [outputs] or [1, outputs]
    Returns float32 [B, outputs] (or [outputs] for unbatched input).
    """
    squeeze = (x.ndim == 1)
    if squeeze:
        # Whole-vector L2 norm == row-wise norm of a single-row batch.
        x = x[None, :]

    B, inputs = x.shape
    hiddens = w1.shape[1]
    outputs = w2.shape[1]
    b1 = jnp.reshape(b1, (1, hiddens)).astype(jnp.float32)
    b2 = jnp.reshape(b2, (1, outputs)).astype(jnp.float32)

    # Lane-dense feature padding (zero-filled -> mathematically inert).
    hiddens_p = _round_up(hiddens, _LANE)
    outputs_p = _round_up(outputs, _LANE)

    wdt = jnp.dtype(compute_dtype)
    x_c = x.astype(wdt)
    w1_p = jnp.pad(w1.astype(wdt), ((0, 0), (0, hiddens_p - hiddens)))
    b1_p = jnp.pad(b1, ((0, 0), (0, hiddens_p - hiddens)))
    w2_p = jnp.pad(w2.astype(wdt),
                   ((0, hiddens_p - hiddens), (0, outputs_p - outputs)))
    b2_p = jnp.pad(b2, ((0, 0), (0, outputs_p - outputs)))

    vmem_limit = _vmem_limit_bytes()

    if tile_b is None:
        # Rough VMEM accounting: resident weights (assume 2 buffers worst case)
        # + per-row streamed tiles and in-kernel f32 intermediates.
        wbytes = (2 * wdt.itemsize * (inputs * hiddens_p + hiddens_p * outputs_p)
                  + 2 * 4 * (hiddens_p + outputs_p))
        per_row = (2 * wdt.itemsize * inputs          # x tile, double buffered
                   + 2 * 4 * outputs_p                # out tile, double buffered
                   + (4 + wdt.itemsize) * hiddens_p   # h (f32) + bf16 copy
                   + 2 * 4 * outputs_p)               # y + normalized y (f32)
        max_tile = max((vmem_limit // 2 - wbytes) // per_row,
                       _TILE_B_CANDIDATES[-1])
        tile_b = _pick_tile_b(B, max_tile)
    tile_b = max(16, _round_up(tile_b, 16))   # sublane-aligned for bf16 tiles

    Bp = _round_up(B, tile_b)
    if Bp != B:
        x_c = jnp.pad(x_c, ((0, Bp - B), (0, 0)))

    grid = (Bp // tile_b,)

    flops = 2 * Bp * (inputs * hiddens_p + hiddens_p * outputs_p)
    bytes_accessed = (wdt.itemsize * (Bp * inputs + inputs * hiddens_p
                                      + hiddens_p * outputs_p)
                      + 4 * (hiddens_p + outputs_p + Bp * outputs_p))

    def weight_spec(shape, single_buffer):
        if single_buffer:
            # Constant index_map -> block never changes; a single buffer halves
            # the resident-weight VMEM cost (matters at v7x's 64 MiB/TC).
            return pl.BlockSpec(shape, lambda i: (0, 0),
                                pipeline_mode=pl.Buffered(1))
        return pl.BlockSpec(shape, lambda i: (0, 0))

    def run(single_buffer_weights):
        return pl.pallas_call(
            nonlinear_model_kernel,
            out_shape=jax.ShapeDtypeStruct((Bp, outputs_p), jnp.float32),
            grid_spec=pltpu.PrefetchScalarGridSpec(
                num_scalar_prefetch=0,
                grid=grid,
                in_specs=[
                    # activations stream per batch tile
                    pl.BlockSpec((tile_b, inputs), lambda i: (i, 0)),
                    # weights / biases stay VMEM-resident
                    weight_spec((inputs, hiddens_p), single_buffer_weights),
                    weight_spec((1, hiddens_p), single_buffer_weights),
                    weight_spec((hiddens_p, outputs_p), single_buffer_weights),
                    weight_spec((1, outputs_p), single_buffer_weights),
                ],
                out_specs=pl.BlockSpec((tile_b, outputs_p), lambda i: (i, 0)),
            ),
            compiler_params=pltpu.CompilerParams(
                dimension_semantics=("parallel",),
                vmem_limit_bytes=vmem_limit,
            ),
            cost_estimate=pl.CostEstimate(
                flops=flops, transcendentals=Bp,
                bytes_accessed=bytes_accessed),
        )(x_c, w1_p, b1_p, w2_p, b2_p)

    try:
        out = run(single_buffer_weights=True)
    except Exception:
        # Older jax without BlockSpec(pipeline_mode=...) or a backend that
        # rejects single-buffered blocks: fall back to default double buffering.
        out = run(single_buffer_weights=False)

    out = out[:B, :outputs]
    return out[0] if squeeze else out


def reference(x, w1, b1, w2, b2, *, compute_dtype=jnp.float32):
    """Pure-JAX forward with the same casting policy as the kernel."""
    wdt = jnp.dtype(compute_dtype)
    b1 = jnp.reshape(b1, (1, -1)).astype(jnp.float32)
    b2 = jnp.reshape(b2, (1, -1)).astype(jnp.float32)
    h = jnp.dot(x.astype(wdt), w1.astype(wdt),
                preferred_element_type=jnp.float32) + b1
    h = jnp.maximum(h, 0.0)
    y = jnp.dot(h.astype(wdt), w2.astype(wdt),
                preferred_element_type=jnp.float32) + b2
    return y / jnp.linalg.norm(y, axis=1, keepdims=True)


if __name__ == "__main__":
    key = jax.random.PRNGKey(0)
    batch, inputs, hiddens, outputs = 2, 16, 32, 8

    k_x, k_w1, k_b1, k_w2, k_b2 = jax.random.split(key, 5)

    x = jax.random.normal(k_x, (batch, inputs), dtype=jnp.float32)

    # Deterministic init mimicking nn.Linear: U(-1/sqrt(fan_in), 1/sqrt(fan_in))
    bound1 = 1.0 / (inputs ** 0.5)
    w1 = jax.random.uniform(k_w1, (inputs, hiddens), jnp.float32, -bound1, bound1)
    b1 = jax.random.uniform(k_b1, (hiddens,), jnp.float32, -bound1, bound1)

    bound2 = 1.0 / (hiddens ** 0.5)
    w2 = jax.random.uniform(k_w2, (hiddens, outputs), jnp.float32, -bound2, bound2)
    b2 = jax.random.uniform(k_b2, (outputs,), jnp.float32, -bound2, bound2)

    out = nonlinear_model(x, w1, b1, w2, b2)
    out = jax.block_until_ready(out)
    assert out.shape == (batch, outputs)

    # Exact check against a reference that uses the same bf16-MXU casts.
    ref_bf16 = reference(x, w1, b1, w2, b2, compute_dtype=jnp.bfloat16)
    err_b = float(jnp.max(jnp.abs(out - ref_bf16)))
    assert jnp.allclose(out, ref_bf16, atol=2e-3, rtol=2e-3), (
        f"max abs err vs bf16 reference = {err_b}")

    # Semantic check against the full-f32 PyTorch forward (bf16 MXU tolerance).
    ref_f32 = reference(x, w1, b1, w2, b2, compute_dtype=jnp.float32)
    err_f = float(jnp.max(jnp.abs(out - ref_f32)))
    assert jnp.allclose(out, ref_f32, atol=5e-2, rtol=5e-2), (
        f"max abs err vs f32 reference = {err_f}")

    print("KERNEL_OK")
</pallas_src>

<mosaic_0001>
module attributes {stable_mosaic.version = 11 : i64} {
  func.func @nonlinear_model_kernel(%arg0: i32, %arg1: memref<16x16xbf16, #tpu.memory_space<vmem>>, %arg2: memref<16x128xbf16, #tpu.memory_space<vmem>>, %arg3: memref<1x128xf32, #tpu.memory_space<vmem>>, %arg4: memref<128x128xbf16, #tpu.memory_space<vmem>>, %arg5: memref<1x128xf32, #tpu.memory_space<vmem>>, %arg6: memref<16x128xf32, #tpu.memory_space<vmem>>) attributes {dimension_semantics = [#tpu.dimension_semantics<parallel>], iteration_bounds = array<i64: 1>, scalar_prefetch = 0 : i64, scratch_operands = 0 : i64, tpu.core_type = #tpu.core_type<tc>, window_params = [{transform_indices = @transform_0, window_bounds = array<i64: 16, 16>}, {pipeline_mode = #tpu.pipeline_mode<synchronous>, transform_indices = @transform_1, window_bounds = array<i64: 16, 128>}, {pipeline_mode = #tpu.pipeline_mode<synchronous>, transform_indices = @transform_2, window_bounds = array<i64: 1, 128>}, {pipeline_mode = #tpu.pipeline_mode<synchronous>, transform_indices = @transform_3, window_bounds = array<i64: 128, 128>}, {pipeline_mode = #tpu.pipeline_mode<synchronous>, transform_indices = @transform_4, window_bounds = array<i64: 1, 128>}, {transform_indices = @transform_5, window_bounds = array<i64: 16, 128>}]} {
    %c0 = arith.constant 0 : index
    %c0_0 = arith.constant 0 : index
    %0 = vector.load %arg1[%c0, %c0_0] : memref<16x16xbf16, #tpu.memory_space<vmem>>, vector<16x16xbf16>
    %c0_1 = arith.constant 0 : index
    %c0_2 = arith.constant 0 : index
    %1 = vector.load %arg2[%c0_1, %c0_2] : memref<16x128xbf16, #tpu.memory_space<vmem>>, vector<16x128xbf16>
    %cst = arith.constant dense<0.000000e+00> : vector<16x128xf32>
    %2 = tpu.matmul %0, %1, %cst {dimension_numbers = #tpu.dot_dimension_numbers<[1], [0], [0], [1], [0, 0, 1, 1], [], []>} : vector<16x16xbf16>, vector<16x128xbf16>, vector<16x128xf32> -> vector<16x128xf32>
    %c0_3 = arith.constant 0 : index
    %c0_4 = arith.constant 0 : index
    %3 = vector.load %arg3[%c0_3, %c0_4] : memref<1x128xf32, #tpu.memory_space<vmem>>, vector<1x128xf32>
    %4 = vector.broadcast %3 : vector<1x128xf32> to vector<16x128xf32>
    %5 = arith.addf %2, %4 : vector<16x128xf32>
    %cst_5 = arith.constant 0.000000e+00 : f32
    %6 = vector.broadcast %cst_5 : f32 to vector<16x128xf32>
    %7 = arith.maximumf %5, %6 : vector<16x128xf32>
    %8 = arith.truncf %7 : vector<16x128xf32> to vector<16x128xbf16>
    %c0_6 = arith.constant 0 : index
    %c0_7 = arith.constant 0 : index
    %9 = vector.load %arg4[%c0_6, %c0_7] : memref<128x128xbf16, #tpu.memory_space<vmem>>, vector<128x128xbf16>
    %cst_8 = arith.constant dense<0.000000e+00> : vector<16x128xf32>
    %10 = tpu.matmul %8, %9, %cst_8 {dimension_numbers = #tpu.dot_dimension_numbers<[1], [0], [0], [1], [0, 0, 1, 1], [], []>} : vector<16x128xbf16>, vector<128x128xbf16>, vector<16x128xf32> -> vector<16x128xf32>
    %c0_9 = arith.constant 0 : index
    %c0_10 = arith.constant 0 : index
    %11 = vector.load %arg5[%c0_9, %c0_10] : memref<1x128xf32, #tpu.memory_space<vmem>>, vector<1x128xf32>
    %12 = vector.broadcast %11 : vector<1x128xf32> to vector<16x128xf32>
    %13 = arith.addf %10, %12 : vector<16x128xf32>
    %14 = arith.mulf %13, %13 : vector<16x128xf32>
    %cst_11 = arith.constant dense<0.000000e+00> : vector<16xf32>
    %15 = vector.multi_reduction <add>, %14, %cst_11 [1] : vector<16x128xf32> to vector<16xf32>
    %16 = vector.shape_cast %15 : vector<16xf32> to vector<16x1xf32>
    %17 = math.rsqrt %16 : vector<16x1xf32>
    %18 = vector.broadcast %17 : vector<16x1xf32> to vector<16x128xf32>
    %19 = arith.mulf %13, %18 : vector<16x128xf32>
    %c0_12 = arith.constant 0 : index
    %c0_13 = arith.constant 0 : index
    %20 = vector.load %arg6[%c0_12, %c0_13] : memref<16x128xf32, #tpu.memory_space<vmem>>, vector<16x128xf32>
    tpu.vector_store %arg6[%c0_12, %c0_13], %19 {strides = array<i32>} : memref<16x128xf32, #tpu.memory_space<vmem>>, vector<16x128xf32>,
    return
  }
  func.func @transform_0(%arg0: i32) -> (i32, i32) {
    %c0_i32 = arith.constant 0 : i32
    %c0_i32_0 = arith.constant 0 : i32
    return %arg0, %c0_i32 : i32, i32
  }
  func.func @transform_1(%arg0: i32) -> (i32, i32) {
    %c0_i32 = arith.constant 0 : i32
    %c0_i32_0 = arith.constant 0 : i32
    %c0_i32_1 = arith.constant 0 : i32
    return %c0_i32, %c0_i32_0 : i32, i32
  }
  func.func @transform_2(%arg0: i32) -> (i32, i32) {
    %c0_i32 = arith.constant 0 : i32
    %c0_i32_0 = arith.constant 0 : i32
    %c0_i32_1 = arith.constant 0 : i32
    return %c0_i32, %c0_i32_0 : i32, i32
  }
  func.func @transform_3(%arg0: i32) -> (i32, i32) {
    %c0_i32 = arith.constant 0 : i32
    %c0_i32_0 = arith.constant 0 : i32
    %c0_i32_1 = arith.constant 0 : i32
    return %c0_i32, %c0_i32_0 : i32, i32
  }
  func.func @transform_4(%arg0: i32) -> (i32, i32) {
    %c0_i32 = arith.constant 0 : i32
    %c0_i32_0 = arith.constant 0 : i32
    %c0_i32_1 = arith.constant 0 : i32
    return %c0_i32, %c0_i32_0 : i32, i32
  }
  func.func @transform_5(%arg0: i32) -> (i32, i32) {
    %c0_i32 = arith.constant 0 : i32
    %c0_i32_0 = arith.constant 0 : i32
    return %arg0, %c0_i32 : i32, i32
  }
}

module attributes {stable_mosaic.version = 11 : i64} {
  func.func @nonlinear_model_kernel(%arg0: i32, %arg1: memref<16x16xbf16, #tpu.memory_space<vmem>>, %arg2: memref<16x128xbf16, #tpu.memory_space<vmem>>, %arg3: memref<1x128xf32, #tpu.memory_space<vmem>>, %arg4: memref<128x128xbf16, #tpu.memory_space<vmem>>, %arg5: memref<1x128xf32, #tpu.memory_space<vmem>>, %arg6: memref<16x128xf32, #tpu.memory_space<vmem>>) attributes {dimension_semantics = [#tpu.dimension_semantics<parallel>], iteration_bounds = array<i64: 1>, scalar_prefetch = 0 : i64, scratch_operands = 0 : i64, tpu.core_type = #tpu.core_type<tc>, window_params = [{transform_indices = @transform_0, window_bounds = array<i64: 16, 16>}, {pipeline_mode = #tpu.pipeline_mode<synchronous>, transform_indices = @transform_1, window_bounds = array<i64: 16, 128>}, {pipeline_mode = #tpu.pipeline_mode<synchronous>, transform_indices = @transform_2, window_bounds = array<i64: 1, 128>}, {pipeline_mode = #tpu.pipeline_mode<synchronous>, transform_indices = @transform_3, window_bounds = array<i64: 128, 128>}, {pipeline_mode = #tpu.pipeline_mode<synchronous>, transform_indices = @transform_4, window_bounds = array<i64: 1, 128>}, {transform_indices = @transform_5, window_bounds = array<i64: 16, 128>}]} {
    %c0 = arith.constant 0 : index
    %c0_0 = arith.constant 0 : index
    %0 = vector.load %arg1[%c0, %c0_0] : memref<16x16xbf16, #tpu.memory_space<vmem>>, vector<16x16xbf16>
    %c0_1 = arith.constant 0 : index
    %c0_2 = arith.constant 0 : index
    %1 = vector.load %arg2[%c0_1, %c0_2] : memref<16x128xbf16, #tpu.memory_space<vmem>>, vector<16x128xbf16>
    %cst = arith.constant dense<0.000000e+00> : vector<16x128xf32>
    %2 = tpu.matmul %0, %1, %cst {dimension_numbers = #tpu.dot_dimension_numbers<[1], [0], [0], [1], [0, 0, 1, 1], [], []>} : vector<16x16xbf16>, vector<16x128xbf16>, vector<16x128xf32> -> vector<16x128xf32>
    %c0_3 = arith.constant 0 : index
    %c0_4 = arith.constant 0 : index
    %3 = vector.load %arg3[%c0_3, %c0_4] : memref<1x128xf32, #tpu.memory_space<vmem>>, vector<1x128xf32>
    %4 = vector.broadcast %3 : vector<1x128xf32> to vector<16x128xf32>
    %5 = arith.addf %2, %4 : vector<16x128xf32>
    %cst_5 = arith.constant 0.000000e+00 : f32
    %6 = vector.broadcast %cst_5 : f32 to vector<16x128xf32>
    %7 = arith.maximumf %5, %6 : vector<16x128xf32>
    %8 = arith.truncf %7 : vector<16x128xf32> to vector<16x128xbf16>
    %c0_6 = arith.constant 0 : index
    %c0_7 = arith.constant 0 : index
    %9 = vector.load %arg4[%c0_6, %c0_7] : memref<128x128xbf16, #tpu.memory_space<vmem>>, vector<128x128xbf16>
    %cst_8 = arith.constant dense<0.000000e+00> : vector<16x128xf32>
    %10 = tpu.matmul %8, %9, %cst_8 {dimension_numbers = #tpu.dot_dimension_numbers<[1], [0], [0], [1], [0, 0, 1, 1], [], []>} : vector<16x128xbf16>, vector<128x128xbf16>, vector<16x128xf32> -> vector<16x128xf32>
    %c0_9 = arith.constant 0 : index
    %c0_10 = arith.constant 0 : index
    %11 = vector.load %arg5[%c0_9, %c0_10] : memref<1x128xf32, #tpu.memory_space<vmem>>, vector<1x128xf32>
    %12 = vector.broadcast %11 : vector<1x128xf32> to vector<16x128xf32>
    %13 = arith.addf %10, %12 : vector<16x128xf32>
    %14 = arith.mulf %13, %13 : vector<16x128xf32>
    %cst_11 = arith.constant dense<0.000000e+00> : vector<16xf32>
    %15 = vector.multi_reduction <add>, %14, %cst_11 [1] : vector<16x128xf32> to vector<16xf32>
    %16 = vector.shape_cast %15 : vector<16xf32> to vector<16x1xf32>
    %17 = math.rsqrt %16 : vector<16x1xf32>
    %18 = vector.broadcast %17 : vector<16x1xf32> to vector<16x128xf32>
    %19 = arith.mulf %13, %18 : vector<16x128xf32>
    %c0_12 = arith.constant 0 : index
    %c0_13 = arith.constant 0 : index
    %20 = vector.load %arg6[%c0_12, %c0_13] : memref<16x128xf32, #tpu.memory_space<vmem>>, vector<16x128xf32>
    tpu.vector_store %arg6[%c0_12, %c0_13], %19 {strides = array<i32>} : memref<16x128xf32, #tpu.memory_space<vmem>>, vector<16x128xf32>,
    return
  }
  func.func @transform_0(%arg0: i32) -> (i32, i32) {
    %c0_i32 = arith.constant 0 : i32
    %c0_i32_0 = arith.constant 0 : i32
    return %arg0, %c0_i32 : i32, i32
  }
  func.func @transform_1(%arg0: i32) -> (i32, i32) {
    %c0_i32 = arith.constant 0 : i32
    %c0_i32_0 = arith.constant 0 : i32
    %c0_i32_1 = arith.constant 0 : i32
    return %c0_i32, %c0_i32_0 : i32, i32
  }
  func.func @transform_2(%arg0: i32) -> (i32, i32) {
    %c0_i32 = arith.constant 0 : i32
    %c0_i32_0 = arith.constant 0 : i32
    %c0_i32_1 = arith.constant 0 : i32
    return %c0_i32, %c0_i32_0 : i32, i32
  }
  func.func @transform_3(%arg0: i32) -> (i32, i32) {
    %c0_i32 = arith.constant 0 : i32
    %c0_i32_0 = arith.constant 0 : i32
    %c0_i32_1 = arith.constant 0 : i32
    return %c0_i32, %c0_i32_0 : i32, i32
  }
  func.func @transform_4(%arg0: i32) -> (i32, i32) {
    %c0_i32 = arith.constant 0 : i32
    %c0_i32_0 = arith.constant 0 : i32
    %c0_i32_1 = arith.constant 0 : i32
    return %c0_i32, %c0_i32_0 : i32, i32
  }
  func.func @transform_5(%arg0: i32) -> (i32, i32) {
    %c0_i32 = arith.constant 0 : i32
    %c0_i32_0 = arith.constant 0 : i32
    return %arg0, %c0_i32 : i32, i32
  }
}

</mosaic_0001>

<llo_original>
// kernel: tpu_custom_call.1
$region0: #{tpu_custom_call.1}
  #allocation0 [shape = 'u32[]', space=smem, size = 0x4, offset = 0x4, fixed_abs, tag = 'smem constant byte address 0x4 - core index']
  #allocation1 [shape = 'u32[72,128]{1,0:T(1,128)}', space=vmem, size = 0x9000, scoped, tag = 'internal scratch']
  %s0 = inlined_call_operand.hbm [shape: bf16[16,16], index: 0, kind: input, shape index: {}]
  %s1 = inlined_call_operand.hbm [shape: bf16[16,128], index: 1, kind: input, shape index: {}]
  %s2 = inlined_call_operand.vmem [shape: f32[1,128], index: 2, kind: input, shape index: {}]
  %s3 = inlined_call_operand.hbm [shape: bf16[128,128], index: 3, kind: input, shape index: {}]
  %s4 = inlined_call_operand.vmem [shape: f32[1,128], index: 4, kind: input, shape index: {}]
  %s5 = inlined_call_operand.hbm [shape: f32[16,128], index: 5, kind: output, shape index: {}]
  %s6 = sld [smem:[#allocation0]]
  $region42: #{tpu_custom_call.1} parent=0
    _
  %s8 = ssub.s32 1, %s6
  %s9 = scalar_select 0, %s8, %s6
  $region1: #{tpu_custom_call.1} parent=0
    #allocation2 [shape = 'u8[4096]{0}', space=vmem, size = 0x1000, scoped, tag = 'input window, operand 0, single buffered']
    #allocation3 [shape = 's32[1]{0}', space=sflag, size = 0x4, scoped, tag = 'scoped memory for tpu_custom_call.1']
    #allocation4 [shape = 's32[1]{0}', space=sflag, size = 0x4, scoped, tag = 'scoped memory for tpu_custom_call.1']
    #allocation5 [shape = 'u8[4096]{0}', space=vmem, size = 0x1000, scoped, tag = 'input window, operand 1, single buffered']
    #allocation6 [shape = 's32[1]{0}', space=sflag, size = 0x4, scoped, tag = 'scoped memory for tpu_custom_call.1']
    #allocation7 [shape = 'u8[32768]{0}', space=vmem, size = 0x8000, scoped, tag = 'input window, operand 3, single buffered']
    #allocation8 [shape = 'u8[8192]{0}', space=vmem, size = 0x2000, scoped, tag = 'output window, operand 0, single buffered']
    %10 = vsyncpa [#allocation3], 0
    %11 = vsyncpa [#allocation6], 0
    %12 = vsyncpa [#allocation4], 0
    // Predicated region
    $region2: #{tpu_custom_call.1} parent=1 // pred_check
      _
    $region3: #{tpu_custom_call.1} parent=1 // pred_check_branch
      %14 = sbr.rel (0) target = $region5
    $region4: #{tpu_custom_call.1} parent=1 // pred_region
      %16 = vsyncadd [#allocation3], 0
      %s17 = sshll.u32 %s0, 4
      %s18 = int_to_ptr.hbm [resolvable:$true] %s17
      %s19 = sshll.u32 [#allocation2], 4
      %s20 = int_to_ptr.vmem [resolvable:$true] %s19
      %25 = dma.hbm_to_vmem [thread:$0]  %s18, 128, %s20, [#allocation3], 64, 64, 4
    $region5: #{tpu_custom_call.1} parent=1 // pred_fallthru
      _
    // Predicated region
    $region6: #{tpu_custom_call.1} parent=1 // pred_check
      _
    $region7: #{tpu_custom_call.1} parent=1 // pred_check_branch
      %27 = sbr.rel (0) target = $region9
    $region8: #{tpu_custom_call.1} parent=1 // pred_region
      %29 = vsyncadd [#allocation6], 0
      %s30 = sshll.u32 %s1, 4
      %s31 = int_to_ptr.hbm [resolvable:$true] %s30
      %s32 = sshll.u32 [#allocation5], 4
      %s33 = int_to_ptr.vmem [resolvable:$true] %s32
      %38 = dma.hbm_to_vmem [thread:$0]  %s31, 128, %s33, [#allocation6], 64, 64, 4
    $region9: #{tpu_custom_call.1} parent=1 // pred_fallthru
      _
    // Predicated region
    $region10: #{tpu_custom_call.1} parent=1 // pred_check
      _
    $region11: #{tpu_custom_call.1} parent=1 // pred_check_branch
      %40 = sbr.rel (0) target = $region13
    $region12: #{tpu_custom_call.1} parent=1 // pred_region
      _
    $region13: #{tpu_custom_call.1} parent=1 // pred_fallthru
      _
    // Predicated region
    $region14: #{tpu_custom_call.1} parent=1 // pred_check
      _
    $region15: #{tpu_custom_call.1} parent=1 // pred_check_branch
      %42 = sbr.rel (0) target = $region17
    $region16: #{tpu_custom_call.1} parent=1 // pred_region
      %44 = vsyncadd [#allocation6], 0
      %s45 = sshll.u32 %s3, 4
      %s46 = int_to_ptr.hbm [resolvable:$true] %s45
      %s47 = sshll.u32 [#allocation7], 4
      %s48 = int_to_ptr.vmem [resolvable:$true] %s47
      %53 = dma.hbm_to_vmem [thread:$0]  %s46, 1024, %s48, [#allocation6], 64, 64, 4
    $region17: #{tpu_custom_call.1} parent=1 // pred_fallthru
      _
    // Predicated region
    $region18: #{tpu_custom_call.1} parent=1 // pred_check
      _
    $region19: #{tpu_custom_call.1} parent=1 // pred_check_branch
      %55 = sbr.rel (0) target = $region21
    $region20: #{tpu_custom_call.1} parent=1 // pred_region
      _
    $region21: #{tpu_custom_call.1} parent=1 // pred_fallthru
      _
    // Predicated region
    $region22: #{tpu_custom_call.1} parent=1 // pred_check
      _
    $region23: #{tpu_custom_call.1} parent=1 // pred_check_branch
      %57 = sbr.rel (0) target = $region25
    $region24: #{tpu_custom_call.1} parent=1 // pred_region
      %59 = dma.done [#allocation3], 128
    $region25: #{tpu_custom_call.1} parent=1 // pred_fallthru
      _
    // Predicated region
    $region26: #{tpu_custom_call.1} parent=1 // pred_check
      _
    $region27: #{tpu_custom_call.1} parent=1 // pred_check_branch
      %61 = sbr.rel (0) target = $region29
    $region28: #{tpu_custom_call.1} parent=1 // pred_region
      %63 = dma.done [#allocation6], 128
    $region29: #{tpu_custom_call.1} parent=1 // pred_fallthru
      _
    // Predicated region
    $region30: #{tpu_custom_call.1} parent=1 // pred_check
      _
    $region31: #{tpu_custom_call.1} parent=1 // pred_check_branch
      %65 = sbr.rel (0) target = $region33
    $region32: #{tpu_custom_call.1} parent=1 // pred_region
      %67 = dma.done [#allocation6], 1024
    $region33: #{tpu_custom_call.1} parent=1 // pred_fallthru
      _
    %v69 = vld [vmem:[#allocation2] sm:$0xf]
    %v70 = vld [vmem:[#allocation2 + $0x4] sm:$0xf]
    %v71 = vld [vmem:[#allocation5] sm:$0xf]
    %v72 = vld [vmem:[#allocation5 + $0x4] sm:$0xf]
    %v73 = vld [vmem:[%s2] sm:$0x1]
    %v75 = vperm.slane %v73, 0
    %v79 = vunpack.c.l.b16 %v69
    %v80 = vunpack.c.l.b16 %v70
    %v81 = vpack.c.b16 %v80, %v79
    %v84 = vunpack.c.l.b16 %v71
    %v85 = vunpack.c.l.b16 %v72
    %v86 = vpack.c.b16 %v85, %v84
    %vm88 = vcmask 130048
    %v90 = vsel %vm88, %v81, 0
    %92 = vmatpush.bf16.msra.mxu0 0
    %93 = vmatpush.bf16.msra.mxu0 0
    %94 = vmatpush.bf16.msra.mxu0 0
    %95 = vmatpush.bf16.msra.mxu0 0
    %96 = vmatpush.bf16.msra.mxu0 0
    %97 = vmatpush.bf16.msra.mxu0 0
    %98 = vmatpush.bf16.msra.mxu0 0
    %99 = vmatpush.bf16.msra.mxu0 %v86
    %100 = vmatmul.bf16.gmra.mxu0 %v90
    %v101 = vpop.f32.mrf.mxu0
    %v102 = vadd.f32 %v75, %v101
    %v103 = vpop.f32.mrf.mxu0
    %v104 = vadd.f32 %v75, %v103
    %105 = vdwg.mxu0
    %v106 = vmax.f32 %v102, 0.0
    %v107 = vmax.f32 %v104, 0.0
    %v108 = vpack.c.bf16 %v107, %v106
    %v109 = vld [vmem:[#allocation7] sm:$0xf]
    %v110 = vld [vmem:[#allocation7 + $0x4] sm:$0xf]
    %v111 = vld [vmem:[#allocation7 + $0x8] sm:$0xf]
    %v112 = vld [vmem:[#allocation7 + $0xc] sm:$0xf]
    %v113 = vld [vmem:[#allocation7 + $0x10] sm:$0xf]
    %v114 = vld [vmem:[#allocation7 + $0x14] sm:$0xf]
    %v115 = vld [vmem:[#allocation7 + $0x18] sm:$0xf]
    %v116 = vld [vmem:[#allocation7 + $0x1c] sm:$0xf]
    %v117 = vld [vmem:[#allocation7 + $0x20] sm:$0xf]
    %v118 = vld [vmem:[#allocation7 + $0x24] sm:$0xf]
    %v119 = vld [vmem:[#allocation7 + $0x28] sm:$0xf]
    %v120 = vld [vmem:[#allocation7 + $0x2c] sm:$0xf]
    %v121 = vld [vmem:[#allocation7 + $0x30] sm:$0xf]
    %v122 = vld [vmem:[#allocation7 + $0x34] sm:$0xf]
    %v123 = vld [vmem:[#allocation7 + $0x38] sm:$0xf]
    %v124 = vld [vmem:[#allocation7 + $0x3c] sm:$0xf]
    %v125 = vld [vmem:[%s4] sm:$0x1]
    %v127 = vperm.slane %v125, 0
    %v145 = vunpack.c.l.b16 %v109
    %v146 = vunpack.c.l.b16 %v110
    %v147 = vunpack.c.l.b16 %v111
    %v148 = vunpack.c.l.b16 %v112
    %v149 = vunpack.c.l.b16 %v113
    %v150 = vunpack.c.l.b16 %v114
    %v151 = vunpack.c.l.b16 %v115
    %v152 = vunpack.c.l.b16 %v116
    %v153 = vunpack.c.l.b16 %v117
    %v154 = vunpack.c.l.b16 %v118
    %v155 = vunpack.c.l.b16 %v119
    %v156 = vunpack.c.l.b16 %v120
    %v157 = vunpack.c.l.b16 %v121
    %v158 = vunpack.c.l.b16 %v122
    %v159 = vunpack.c.l.b16 %v123
    %v160 = vunpack.c.l.b16 %v124
    %v161 = vpack.c.b16 %v146, %v145
    %v162 = vpack.c.b16 %v148, %v147
    %v163 = vpack.c.b16 %v150, %v149
    %v164 = vpack.c.b16 %v152, %v151
    %v165 = vpack.c.b16 %v154, %v153
    %v166 = vpack.c.b16 %v156, %v155
    %v167 = vpack.c.b16 %v158, %v157
    %v168 = vpack.c.b16 %v160, %v159
    %177 = vmatpush.bf16.msra.mxu0 %v168
    %178 = vmatpush.bf16.msra.mxu0 %v167
    %179 = vmatpush.bf16.msra.mxu0 %v166
    %180 = vmatpush.bf16.msra.mxu0 %v165
    %181 = vmatpush.bf16.msra.mxu0 %v164
    %182 = vmatpush.bf16.msra.mxu0 %v163
    %183 = vmatpush.bf16.msra.mxu0 %v162
    %184 = vmatpush.bf16.msra.mxu0 %v161
    %185 = vmatmul.bf16.gmra.mxu0 %v108
    %v186 = vpop.f32.mrf.mxu0
    %v187 = vadd.f32 %v127, %v186
    %v188 = vpop.f32.mrf.mxu0
    %v189 = vadd.f32 %v127, %v188
    %190 = vdwg.mxu0
    %v191 = vmul.f32 %v187, %v187
    %v192 = vmul.f32 %v189, %v189
    %193 = vadd.xlane.f32.xlu0 %v191
    %v194 = vpop.xlane.xlu0 %193
    %195 = vadd.xlane.f32.xlu0 %v192
    %v196 = vpop.xlane.xlu0 %195
    %v197 = vrsqrt.pop %v194
    %v198 = vmul.f32 %v197, %v194
    %v199 = vmul.f32 %v198, %v197
    %v200 = vmul.f32 0.5, %v199
    %v201 = vsub.f32 1.5, %v200
    %v202 = vmul.f32 %v197, %v201
    %vm203 = vweird.f32 %v194
    %vm204 = vweird.f32 %v197
    %vm205 = vmor %vm203, %vm204
    %v206 = vsel %vm205, %v197, %v202
    %v207 = vrsqrt.pop %v196
    %v208 = vmul.f32 %v207, %v196
    %v209 = vmul.f32 %v208, %v207
    %v210 = vmul.f32 0.5, %v209
    %v211 = vsub.f32 1.5, %v210
    %v212 = vmul.f32 %v207, %v211
    %vm213 = vweird.f32 %v196
    %vm214 = vweird.f32 %v207
    %vm215 = vmor %vm213, %vm214
    %v216 = vsel %vm215, %v207, %v212
    %v217 = vmul.f32 %v187, %v206
    %v218 = vmul.f32 %v189, %v216
    %219 = vst [vmem:[#allocation8] sm:$0xff] %v217
    %220 = vst [vmem:[#allocation8 + $0x8] sm:$0xff] %v218
    // Predicated region
    $region34: #{tpu_custom_call.1} parent=1 // pred_check
      _
    $region35: #{tpu_custom_call.1} parent=1 // pred_check_branch
      %222 = sbr.rel (0) target = $region37
    $region36: #{tpu_custom_call.1} parent=1 // pred_region
      %224 = vsyncadd [#allocation4], 0
      %s225 = sshll.u32 [#allocation8], 4
      %s226 = int_to_ptr.vmem [resolvable:$true] %s225
      %s227 = sshll.u32 %s5, 4
      %s228 = int_to_ptr.hbm [resolvable:$true] %s227
      %233 = dma.vmem_to_hbm [thread:$0]  %s226, 256, %s228, [#allocation4], 128, 128, 8
    $region37: #{tpu_custom_call.1} parent=1 // pred_fallthru
      _
    // Predicated region
    $region38: #{tpu_custom_call.1} parent=1 // pred_check
      _
    $region39: #{tpu_custom_call.1} parent=1 // pred_check_branch
      %235 = sbr.rel (0) target = $region41
    $region40: #{tpu_custom_call.1} parent=1 // pred_region
      %237 = dma.done [#allocation4], 256
    $region41: #{tpu_custom_call.1} parent=1 // pred_fallthru
      _
    %238 = vsyncpa [#allocation3], 1
    %239 = vsyncpa [#allocation6], 1
    %240 = vsyncpa [#allocation4], 1

// kernel: tpu_custom_call.1
$region0: #{tpu_custom_call.1}
  #allocation0 [shape = 'u32[]', space=smem, size = 0x4, offset = 0x4, fixed_abs, tag = 'smem constant byte address 0x4 - core index']
  #allocation1 [shape = 'u32[72,128]{1,0:T(1,128)}', space=vmem, size = 0x9000, scoped, tag = 'internal scratch']
  %s0 = inlined_call_operand.hbm [shape: bf16[16,16], index: 0, kind: input, shape index: {}]
  %s1 = inlined_call_operand.hbm [shape: bf16[16,128], index: 1, kind: input, shape index: {}]
  %s2 = inlined_call_operand.vmem [shape: f32[1,128], index: 2, kind: input, shape index: {}]
  %s3 = inlined_call_operand.hbm [shape: bf16[128,128], index: 3, kind: input, shape index: {}]
  %s4 = inlined_call_operand.vmem [shape: f32[1,128], index: 4, kind: input, shape index: {}]
  %s5 = inlined_call_operand.hbm [shape: f32[16,128], index: 5, kind: output, shape index: {}]
  %s6 = sld [smem:[#allocation0]]
  $region42: #{tpu_custom_call.1} parent=0
    _
  %s8 = ssub.s32 1, %s6
  %s9 = scalar_select 0, %s8, %s6
  $region1: #{tpu_custom_call.1} parent=0
    #allocation2 [shape = 'u8[4096]{0}', space=vmem, size = 0x1000, scoped, tag = 'input window, operand 0, single buffered']
    #allocation3 [shape = 's32[1]{0}', space=sflag, size = 0x4, scoped, tag = 'scoped memory for tpu_custom_call.1']
    #allocation4 [shape = 's32[1]{0}', space=sflag, size = 0x4, scoped, tag = 'scoped memory for tpu_custom_call.1']
    #allocation5 [shape = 'u8[4096]{0}', space=vmem, size = 0x1000, scoped, tag = 'input window, operand 1, single buffered']
    #allocation6 [shape = 's32[1]{0}', space=sflag, size = 0x4, scoped, tag = 'scoped memory for tpu_custom_call.1']
    #allocation7 [shape = 'u8[32768]{0}', space=vmem, size = 0x8000, scoped, tag = 'input window, operand 3, single buffered']
    #allocation8 [shape = 'u8[8192]{0}', space=vmem, size = 0x2000, scoped, tag = 'output window, operand 0, single buffered']
    %10 = vsyncpa [#allocation3], 0
    %11 = vsyncpa [#allocation6], 0
    %12 = vsyncpa [#allocation4], 0
    // Predicated region
    $region2: #{tpu_custom_call.1} parent=1 // pred_check
      _
    $region3: #{tpu_custom_call.1} parent=1 // pred_check_branch
      %14 = sbr.rel (0) target = $region5
    $region4: #{tpu_custom_call.1} parent=1 // pred_region
      %16 = vsyncadd [#allocation3], 0
      %s17 = sshll.u32 %s0, 4
      %s18 = int_to_ptr.hbm [resolvable:$true] %s17
      %s19 = sshll.u32 [#allocation2], 4
      %s20 = int_to_ptr.vmem [resolvable:$true] %s19
      %25 = dma.hbm_to_vmem [thread:$0]  %s18, 128, %s20, [#allocation3], 64, 64, 4
    $region5: #{tpu_custom_call.1} parent=1 // pred_fallthru
      _
    // Predicated region
    $region6: #{tpu_custom_call.1} parent=1 // pred_check
      _
    $region7: #{tpu_custom_call.1} parent=1 // pred_check_branch
      %27 = sbr.rel (0) target = $region9
    $region8: #{tpu_custom_call.1} parent=1 // pred_region
      %29 = vsyncadd [#allocation6], 0
      %s30 = sshll.u32 %s1, 4
      %s31 = int_to_ptr.hbm [resolvable:$true] %s30
      %s32 = sshll.u32 [#allocation5], 4
      %s33 = int_to_ptr.vmem [resolvable:$true] %s32
      %38 = dma.hbm_to_vmem [thread:$0]  %s31, 128, %s33, [#allocation6], 64, 64, 4
    $region9: #{tpu_custom_call.1} parent=1 // pred_fallthru
      _
    // Predicated region
    $region10: #{tpu_custom_call.1} parent=1 // pred_check
      _
    $region11: #{tpu_custom_call.1} parent=1 // pred_check_branch
      %40 = sbr.rel (0) target = $region13
    $region12: #{tpu_custom_call.1} parent=1 // pred_region
      _
    $region13: #{tpu_custom_call.1} parent=1 // pred_fallthru
      _
    // Predicated region
    $region14: #{tpu_custom_call.1} parent=1 // pred_check
      _
    $region15: #{tpu_custom_call.1} parent=1 // pred_check_branch
      %42 = sbr.rel (0) target = $region17
    $region16: #{tpu_custom_call.1} parent=1 // pred_region
      %44 = vsyncadd [#allocation6], 0
      %s45 = sshll.u32 %s3, 4
      %s46 = int_to_ptr.hbm [resolvable:$true] %s45
      %s47 = sshll.u32 [#allocation7], 4
      %s48 = int_to_ptr.vmem [resolvable:$true] %s47
      %53 = dma.hbm_to_vmem [thread:$0]  %s46, 1024, %s48, [#allocation6], 64, 64, 4
    $region17: #{tpu_custom_call.1} parent=1 // pred_fallthru
      _
    // Predicated region
    $region18: #{tpu_custom_call.1} parent=1 // pred_check
      _
    $region19: #{tpu_custom_call.1} parent=1 // pred_check_branch
      %55 = sbr.rel (0) target = $region21
    $region20: #{tpu_custom_call.1} parent=1 // pred_region
      _
    $region21: #{tpu_custom_call.1} parent=1 // pred_fallthru
      _
    // Predicated region
    $region22: #{tpu_custom_call.1} parent=1 // pred_check
      _
    $region23: #{tpu_custom_call.1} parent=1 // pred_check_branch
      %57 = sbr.rel (0) target = $region25
    $region24: #{tpu_custom_call.1} parent=1 // pred_region
      %59 = dma.done [#allocation3], 128
    $region25: #{tpu_custom_call.1} parent=1 // pred_fallthru
      _
    // Predicated region
    $region26: #{tpu_custom_call.1} parent=1 // pred_check
      _
    $region27: #{tpu_custom_call.1} parent=1 // pred_check_branch
      %61 = sbr.rel (0) target = $region29
    $region28: #{tpu_custom_call.1} parent=1 // pred_region
      %63 = dma.done [#allocation6], 128
    $region29: #{tpu_custom_call.1} parent=1 // pred_fallthru
      _
    // Predicated region
    $region30: #{tpu_custom_call.1} parent=1 // pred_check
      _
    $region31: #{tpu_custom_call.1} parent=1 // pred_check_branch
      %65 = sbr.rel (0) target = $region33
    $region32: #{tpu_custom_call.1} parent=1 // pred_region
      %67 = dma.done [#allocation6], 1024
    $region33: #{tpu_custom_call.1} parent=1 // pred_fallthru
      _
    %v69 = vld [vmem:[#allocation2] sm:$0xf]
    %v70 = vld [vmem:[#allocation2 + $0x4] sm:$0xf]
    %v71 = vld [vmem:[#allocation5] sm:$0xf]
    %v72 = vld [vmem:[#allocation5 + $0x4] sm:$0xf]
    %v73 = vld [vmem:[%s2] sm:$0x1]
    %v75 = vperm.slane %v73, 0
    %v79 = vunpack.c.l.b16 %v69
    %v80 = vunpack.c.l.b16 %v70
    %v81 = vpack.c.b16 %v80, %v79
    %v84 = vunpack.c.l.b16 %v71
    %v85 = vunpack.c.l.b16 %v72
    %v86 = vpack.c.b16 %v85, %v84
    %vm88 = vcmask 130048
    %v90 = vsel %vm88, %v81, 0
    %92 = vmatpush.bf16.msra.mxu0 0
    %93 = vmatpush.bf16.msra.mxu0 0
    %94 = vmatpush.bf16.msra.mxu0 0
    %95 = vmatpush.bf16.msra.mxu0 0
    %96 = vmatpush.bf16.msra.mxu0 0
    %97 = vmatpush.bf16.msra.mxu0 0
    %98 = vmatpush.bf16.msra.mxu0 0
    %99 = vmatpush.bf16.msra.mxu0 %v86
    %100 = vmatmul.bf16.gmra.mxu0 %v90
    %v101 = vpop.f32.mrf.mxu0
    %v102 = vadd.f32 %v75, %v101
    %v103 = vpop.f32.mrf.mxu0
    %v104 = vadd.f32 %v75, %v103
    %105 = vdwg.mxu0
    %v106 = vmax.f32 %v102, 0.0
    %v107 = vmax.f32 %v104, 0.0
    %v108 = vpack.c.bf16 %v107, %v106
    %v109 = vld [vmem:[#allocation7] sm:$0xf]
    %v110 = vld [vmem:[#allocation7 + $0x4] sm:$0xf]
    %v111 = vld [vmem:[#allocation7 + $0x8] sm:$0xf]
    %v112 = vld [vmem:[#allocation7 + $0xc] sm:$0xf]
    %v113 = vld [vmem:[#allocation7 + $0x10] sm:$0xf]
    %v114 = vld [vmem:[#allocation7 + $0x14] sm:$0xf]
    %v115 = vld [vmem:[#allocation7 + $0x18] sm:$0xf]
    %v116 = vld [vmem:[#allocation7 + $0x1c] sm:$0xf]
    %v117 = vld [vmem:[#allocation7 + $0x20] sm:$0xf]
    %v118 = vld [vmem:[#allocation7 + $0x24] sm:$0xf]
    %v119 = vld [vmem:[#allocation7 + $0x28] sm:$0xf]
    %v120 = vld [vmem:[#allocation7 + $0x2c] sm:$0xf]
    %v121 = vld [vmem:[#allocation7 + $0x30] sm:$0xf]
    %v122 = vld [vmem:[#allocation7 + $0x34] sm:$0xf]
    %v123 = vld [vmem:[#allocation7 + $0x38] sm:$0xf]
    %v124 = vld [vmem:[#allocation7 + $0x3c] sm:$0xf]
    %v125 = vld [vmem:[%s4] sm:$0x1]
    %v127 = vperm.slane %v125, 0
    %v145 = vunpack.c.l.b16 %v109
    %v146 = vunpack.c.l.b16 %v110
    %v147 = vunpack.c.l.b16 %v111
    %v148 = vunpack.c.l.b16 %v112
    %v149 = vunpack.c.l.b16 %v113
    %v150 = vunpack.c.l.b16 %v114
    %v151 = vunpack.c.l.b16 %v115
    %v152 = vunpack.c.l.b16 %v116
    %v153 = vunpack.c.l.b16 %v117
    %v154 = vunpack.c.l.b16 %v118
    %v155 = vunpack.c.l.b16 %v119
    %v156 = vunpack.c.l.b16 %v120
    %v157 = vunpack.c.l.b16 %v121
    %v158 = vunpack.c.l.b16 %v122
    %v159 = vunpack.c.l.b16 %v123
    %v160 = vunpack.c.l.b16 %v124
    %v161 = vpack.c.b16 %v146, %v145
    %v162 = vpack.c.b16 %v148, %v147
    %v163 = vpack.c.b16 %v150, %v149
    %v164 = vpack.c.b16 %v152, %v151
    %v165 = vpack.c.b16 %v154, %v153
    %v166 = vpack.c.b16 %v156, %v155
    %v167 = vpack.c.b16 %v158, %v157
    %v168 = vpack.c.b16 %v160, %v159
    %177 = vmatpush.bf16.msra.mxu0 %v168
    %178 = vmatpush.bf16.msra.mxu0 %v167
    %179 = vmatpush.bf16.msra.mxu0 %v166
    %180 = vmatpush.bf16.msra.mxu0 %v165
    %181 = vmatpush.bf16.msra.mxu0 %v164
    %182 = vmatpush.bf16.msra.mxu0 %v163
    %183 = vmatpush.bf16.msra.mxu0 %v162
    %184 = vmatpush.bf16.msra.mxu0 %v161
    %185 = vmatmul.bf16.gmra.mxu0 %v108
    %v186 = vpop.f32.mrf.mxu0
    %v187 = vadd.f32 %v127, %v186
    %v188 = vpop.f32.mrf.mxu0
    %v189 = vadd.f32 %v127, %v188
    %190 = vdwg.mxu0
    %v191 = vmul.f32 %v187, %v187
    %v192 = vmul.f32 %v189, %v189
    %193 = vadd.xlane.f32.xlu0 %v191
    %v194 = vpop.xlane.xlu0 %193
    %195 = vadd.xlane.f32.xlu0 %v192
    %v196 = vpop.xlane.xlu0 %195
    %v197 = vrsqrt.pop %v194
    %v198 = vmul.f32 %v197, %v194
    %v199 = vmul.f32 %v198, %v197
    %v200 = vmul.f32 0.5, %v199
    %v201 = vsub.f32 1.5, %v200
    %v202 = vmul.f32 %v197, %v201
    %vm203 = vweird.f32 %v194
    %vm204 = vweird.f32 %v197
    %vm205 = vmor %vm203, %vm204
    %v206 = vsel %vm205, %v197, %v202
    %v207 = vrsqrt.pop %v196
    %v208 = vmul.f32 %v207, %v196
    %v209 = vmul.f32 %v208, %v207
    %v210 = vmul.f32 0.5, %v209
    %v211 = vsub.f32 1.5, %v210
    %v212 = vmul.f32 %v207, %v211
    %vm213 = vweird.f32 %v196
    %vm214 = vweird.f32 %v207
    %vm215 = vmor %vm213, %vm214
    %v216 = vsel %vm215, %v207, %v212
    %v217 = vmul.f32 %v187, %v206
    %v218 = vmul.f32 %v189, %v216
    %219 = vst [vmem:[#allocation8] sm:$0xff] %v217
    %220 = vst [vmem:[#allocation8 + $0x8] sm:$0xff] %v218
    // Predicated region
    $region34: #{tpu_custom_call.1} parent=1 // pred_check
      _
    $region35: #{tpu_custom_call.1} parent=1 // pred_check_branch
      %222 = sbr.rel (0) target = $region37
    $region36: #{tpu_custom_call.1} parent=1 // pred_region
      %224 = vsyncadd [#allocation4], 0
      %s225 = sshll.u32 [#allocation8], 4
      %s226 = int_to_ptr.vmem [resolvable:$true] %s225
      %s227 = sshll.u32 %s5, 4
      %s228 = int_to_ptr.hbm [resolvable:$true] %s227
      %233 = dma.vmem_to_hbm [thread:$0]  %s226, 256, %s228, [#allocation4], 128, 128, 8
    $region37: #{tpu_custom_call.1} parent=1 // pred_fallthru
      _
    // Predicated region
    $region38: #{tpu_custom_call.1} parent=1 // pred_check
      _
    $region39: #{tpu_custom_call.1} parent=1 // pred_check_branch
      %235 = sbr.rel (0) target = $region41
    $region40: #{tpu_custom_call.1} parent=1 // pred_region
      %237 = dma.done [#allocation4], 256
    $region41: #{tpu_custom_call.1} parent=1 // pred_fallthru
      _
    %238 = vsyncpa [#allocation3], 1
    %239 = vsyncpa [#allocation6], 1
    %240 = vsyncpa [#allocation4], 1

</llo_original>
